<compile_context>
chip_gen: v7x
topology: tpu7x:2x2x1
jax: 0.10.0
libtpu: 0.0.40
codegen_flags: <defaults>
</compile_context>

<pallas_src>
import jax
import jax.numpy as jnp
from jax.experimental import pallas as pl
from jax.experimental.pallas import tpu as pltpu

INPUT_DIM = 64
H1, H2, H3 = 128, 64, 32
OUT_DIM = 3
OUT_PAD = 8              # padded (lane) width of the final layer / output
MIN_BATCH_TILE = 16      # bf16 native sublane packing is 16 rows
MAX_BATCH_TILE = 4096    # rows per grid step at large batch (fits scoped VMEM)


def _round_up(x, m):
    return ((x + m - 1) // m) * m


def _next_pow2(x):
    p = 1
    while p < x:
        p *= 2
    return p


def _bucket_and_tile(batch):
    """Bucketed padded batch size + batch tile.

    * batch <= MAX_BATCH_TILE: pad to the next power of two (bounded set of
      compile variants).  Batches >= 512 rows split into 2 grid steps so both
      v7x TensorCores get work; smaller batches run as one step.
    * batch > MAX_BATCH_TILE: pad to a multiple of MAX_BATCH_TILE, fixed tile.
    """
    if batch <= MAX_BATCH_TILE:
        b_pad = max(MIN_BATCH_TILE, _next_pow2(batch))
        tile = b_pad if b_pad < 512 else b_pad // 2
    else:
        b_pad = _round_up(batch, MAX_BATCH_TILE)
        tile = MAX_BATCH_TILE
    return b_pad, tile


def _mlp_softmax_kernel(x_ref, w1_ref, b1_ref, w2_ref, b2_ref,
                        w3_ref, b3_ref, w4_ref, b4_ref, o_ref):
    # Layer 1: bf16 rows x bf16 weights, f32 accumulation on the MXU.
    h = jnp.dot(x_ref[...], w1_ref[...], preferred_element_type=jnp.float32)
    h = jnp.maximum(h + b1_ref[...], 0.0)            # ReLU (Dropout = identity)

    h = jnp.dot(h.astype(jnp.bfloat16), w2_ref[...],
                preferred_element_type=jnp.float32)
    h = jnp.maximum(h + b2_ref[...], 0.0)

    h = jnp.dot(h.astype(jnp.bfloat16), w3_ref[...],
                preferred_element_type=jnp.float32)
    h = jnp.maximum(h + b3_ref[...], 0.0)

    logits = jnp.dot(h.astype(jnp.bfloat16), w4_ref[...],
                     preferred_element_type=jnp.float32) + b4_ref[...]

    # Numerically stable softmax over the padded last axis.  Padded columns
    # carry bias -1e30, so exp() underflows to exactly 0 and they contribute
    # nothing to the denominator.  Exact divide => row sums == 1 to f32 ulp.
    m = jnp.max(logits, axis=-1, keepdims=True)
    e = jnp.exp(logits - m)
    denom = jnp.sum(e, axis=-1, keepdims=True)
    o_ref[...] = e / denom


def init_params(key):
    """Deterministic PyTorch-style (uniform +-1/sqrt(fan_in)) init, f32."""
    dims = [(INPUT_DIM, H1), (H1, H2), (H2, H3), (H3, OUT_DIM)]
    params = []
    for i, (fan_in, fan_out) in enumerate(dims):
        kw, kb = jax.random.split(jax.random.fold_in(key, i))
        bound = 1.0 / (fan_in ** 0.5)
        w = jax.random.uniform(kw, (fan_in, fan_out), jnp.float32, -bound, bound)
        b = jax.random.uniform(kb, (1, fan_out), jnp.float32, -bound, bound)
        params.append((w, b))
    return params


def prepare_params(params):
    """One-time per-model prep: pad the last layer to OUT_PAD columns and cast
    weight matrices to bf16 (streamed/MXU operands).  Biases stay f32 (added
    to the f32 accumulator)."""
    (w1, b1), (w2, b2), (w3, b3), (w4, b4) = params
    w4p = jnp.zeros((H3, OUT_PAD), jnp.float32).at[:, :OUT_DIM].set(w4)
    b4p = jnp.full((1, OUT_PAD), -1e30, jnp.float32).at[:, :OUT_DIM].set(b4)
    bf = jnp.bfloat16
    return (w1.astype(bf), b1, w2.astype(bf), b2, w3.astype(bf), b3,
            w4p.astype(bf), b4p)


@jax.jit
def solver_order_predictor(features, prepared):
    """features: (B, 64) float (any float dtype) -> (B, 3) softmax probs (f32)."""
    w1, b1, w2, b2, w3, b3, w4p, b4p = prepared

    B = features.shape[0]
    b_pad, tile = _bucket_and_tile(B)

    # Stream the batch in bf16 (no-op cast if the caller already holds bf16);
    # pad only when the bucketed size differs (cast+pad fuse into one pass).
    x = features.astype(jnp.bfloat16)
    if b_pad != B:
        x = jnp.pad(x, ((0, b_pad - B), (0, 0)))

    # Weights/biases are VMEM-resident across the whole grid (constant map).
    resident = lambda shape: pl.BlockSpec(shape, lambda i: (0, 0))

    out = pl.pallas_call(
        _mlp_softmax_kernel,
        out_shape=jax.ShapeDtypeStruct((b_pad, OUT_PAD), jnp.float32),
        grid_spec=pltpu.PrefetchScalarGridSpec(
            num_scalar_prefetch=0,
            grid=(b_pad // tile,),
            in_specs=[
                pl.BlockSpec((tile, INPUT_DIM), lambda i: (i, 0)),   # streamed rows
                resident((INPUT_DIM, H1)), resident((1, H1)),
                resident((H1, H2)), resident((1, H2)),
                resident((H2, H3)), resident((1, H3)),
                resident((H3, OUT_PAD)), resident((1, OUT_PAD)),
            ],
            out_specs=pl.BlockSpec((tile, OUT_PAD), lambda i: (i, 0)),
        ),
        compiler_params=pltpu.CompilerParams(
            dimension_semantics=("parallel",),
            vmem_limit_bytes=32 * 1024 * 1024),
    )(x, w1, b1, w2, b2, w3, b3, w4p, b4p)

    return out[:B, :OUT_DIM]


def _reference_f32(features, params):
    """Pure-f32 reference matching the PyTorch module (eval mode)."""
    (w1, b1), (w2, b2), (w3, b3), (w4, b4) = params
    h = jnp.maximum(features @ w1 + b1, 0.0)
    h = jnp.maximum(h @ w2 + b2, 0.0)
    h = jnp.maximum(h @ w3 + b3, 0.0)
    return jax.nn.softmax(h @ w4 + b4, axis=-1)


def _reference_bf16(features, prepared):
    """Reference mimicking the kernel's bf16-operand / f32-accumulate math."""
    w1, b1, w2, b2, w3, b3, w4p, b4p = prepared
    up = lambda v: v.astype(jnp.float32)
    q = lambda v: v.astype(jnp.bfloat16).astype(jnp.float32)
    h = jnp.maximum(q(features) @ up(w1) + b1, 0.0)
    h = jnp.maximum(q(h) @ up(w2) + b2, 0.0)
    h = jnp.maximum(q(h) @ up(w3) + b3, 0.0)
    logits = q(h) @ up(w4p) + b4p
    return jax.nn.softmax(logits, axis=-1)[:, :OUT_DIM]


if __name__ == "__main__":
    key = jax.random.PRNGKey(0)
    k_feat, k_param = jax.random.split(key)

    params = init_params(k_param)
    prepared = prepare_params(params)

    # Small, bucket-aligned batch.
    batch = 16
    features = jax.random.normal(k_feat, (batch, INPUT_DIM), jnp.float32)
    probs = jax.block_until_ready(solver_order_predictor(features, prepared))
    assert probs.shape == (batch, OUT_DIM)
    assert bool(jnp.all(jnp.isfinite(probs)))
    # Exact softmax normalisation (exact divide, no approx reciprocal).
    assert jnp.allclose(jnp.sum(probs, axis=-1), 1.0, atol=1e-3)
    # Tight check against a reference using the same bf16 arithmetic.
    assert jnp.allclose(probs, _reference_bf16(features, prepared),
                        atol=2e-3, rtol=2e-3)
    # Looser check against the pure-f32 module reference (bf16 quantisation).
    assert jnp.allclose(probs, _reference_f32(features, params),
                        atol=5e-2, rtol=5e-2)

    # Ragged batch exercises the cast+pad-then-slice / bucketing path.
    batch2 = 13
    features2 = jax.random.normal(jax.random.fold_in(k_feat, 1),
                                  (batch2, INPUT_DIM), jnp.float32)
    probs2 = jax.block_until_ready(solver_order_predictor(features2, prepared))
    assert probs2.shape == (batch2, OUT_DIM)
    assert jnp.allclose(jnp.sum(probs2, axis=-1), 1.0, atol=1e-3)
    assert jnp.allclose(probs2, _reference_bf16(features2, prepared),
                        atol=2e-3, rtol=2e-3)

    print("KERNEL_OK")
</pallas_src>

<mosaic_0001>
module attributes {stable_mosaic.version = 11 : i64} {
  func.func @_mlp_softmax_kernel(%arg0: i32, %arg1: memref<16x64xbf16, #tpu.memory_space<vmem>>, %arg2: memref<64x128xbf16, #tpu.memory_space<vmem>>, %arg3: memref<1x128xf32, #tpu.memory_space<vmem>>, %arg4: memref<128x64xbf16, #tpu.memory_space<vmem>>, %arg5: memref<1x64xf32, #tpu.memory_space<vmem>>, %arg6: memref<64x32xbf16, #tpu.memory_space<vmem>>, %arg7: memref<1x32xf32, #tpu.memory_space<vmem>>, %arg8: memref<32x8xbf16, #tpu.memory_space<vmem>>, %arg9: memref<1x8xf32, #tpu.memory_space<vmem>>, %arg10: memref<16x8xf32, #tpu.memory_space<vmem>>) attributes {dimension_semantics = [#tpu.dimension_semantics<parallel>], iteration_bounds = array<i64: 1>, scalar_prefetch = 0 : i64, scratch_operands = 0 : i64, tpu.core_type = #tpu.core_type<tc>, window_params = [{transform_indices = @transform_0, window_bounds = array<i64: 16, 64>}, {pipeline_mode = #tpu.pipeline_mode<synchronous>, transform_indices = @transform_1, window_bounds = array<i64: 64, 128>}, {pipeline_mode = #tpu.pipeline_mode<synchronous>, transform_indices = @transform_2, window_bounds = array<i64: 1, 128>}, {pipeline_mode = #tpu.pipeline_mode<synchronous>, transform_indices = @transform_3, window_bounds = array<i64: 128, 64>}, {pipeline_mode = #tpu.pipeline_mode<synchronous>, transform_indices = @transform_4, window_bounds = array<i64: 1, 64>}, {pipeline_mode = #tpu.pipeline_mode<synchronous>, transform_indices = @transform_5, window_bounds = array<i64: 64, 32>}, {pipeline_mode = #tpu.pipeline_mode<synchronous>, transform_indices = @transform_6, window_bounds = array<i64: 1, 32>}, {pipeline_mode = #tpu.pipeline_mode<synchronous>, transform_indices = @transform_7, window_bounds = array<i64: 32, 8>}, {pipeline_mode = #tpu.pipeline_mode<synchronous>, transform_indices = @transform_8, window_bounds = array<i64: 1, 8>}, {transform_indices = @transform_9, window_bounds = array<i64: 16, 8>}]} {
    %c0 = arith.constant 0 : index
    %c0_0 = arith.constant 0 : index
    %0 = vector.load %arg1[%c0, %c0_0] : memref<16x64xbf16, #tpu.memory_space<vmem>>, vector<16x64xbf16>
    %c0_1 = arith.constant 0 : index
    %c0_2 = arith.constant 0 : index
    %1 = vector.load %arg2[%c0_1, %c0_2] : memref<64x128xbf16, #tpu.memory_space<vmem>>, vector<64x128xbf16>
    %cst = arith.constant dense<0.000000e+00> : vector<16x128xf32>
    %2 = tpu.matmul %0, %1, %cst {dimension_numbers = #tpu.dot_dimension_numbers<[1], [0], [0], [1], [0, 0, 1, 1], [], []>} : vector<16x64xbf16>, vector<64x128xbf16>, vector<16x128xf32> -> vector<16x128xf32>
    %c0_3 = arith.constant 0 : index
    %c0_4 = arith.constant 0 : index
    %3 = vector.load %arg3[%c0_3, %c0_4] : memref<1x128xf32, #tpu.memory_space<vmem>>, vector<1x128xf32>
    %4 = vector.broadcast %3 : vector<1x128xf32> to vector<16x128xf32>
    %5 = arith.addf %2, %4 : vector<16x128xf32>
    %cst_5 = arith.constant 0.000000e+00 : f32
    %6 = vector.broadcast %cst_5 : f32 to vector<16x128xf32>
    %7 = arith.maximumf %5, %6 : vector<16x128xf32>
    %8 = arith.truncf %7 : vector<16x128xf32> to vector<16x128xbf16>
    %c0_6 = arith.constant 0 : index
    %c0_7 = arith.constant 0 : index
    %9 = vector.load %arg4[%c0_6, %c0_7] : memref<128x64xbf16, #tpu.memory_space<vmem>>, vector<128x64xbf16>
    %cst_8 = arith.constant dense<0.000000e+00> : vector<16x64xf32>
    %10 = tpu.matmul %8, %9, %cst_8 {dimension_numbers = #tpu.dot_dimension_numbers<[1], [0], [0], [1], [0, 0, 1, 1], [], []>} : vector<16x128xbf16>, vector<128x64xbf16>, vector<16x64xf32> -> vector<16x64xf32>
    %c0_9 = arith.constant 0 : index
    %c0_10 = arith.constant 0 : index
    %11 = vector.load %arg5[%c0_9, %c0_10] : memref<1x64xf32, #tpu.memory_space<vmem>>, vector<1x64xf32>
    %12 = vector.broadcast %11 : vector<1x64xf32> to vector<16x64xf32>
    %13 = arith.addf %10, %12 : vector<16x64xf32>
    %cst_11 = arith.constant 0.000000e+00 : f32
    %14 = vector.broadcast %cst_11 : f32 to vector<16x64xf32>
    %15 = arith.maximumf %13, %14 : vector<16x64xf32>
    %16 = arith.truncf %15 : vector<16x64xf32> to vector<16x64xbf16>
    %c0_12 = arith.constant 0 : index
    %c0_13 = arith.constant 0 : index
    %17 = vector.load %arg6[%c0_12, %c0_13] : memref<64x32xbf16, #tpu.memory_space<vmem>>, vector<64x32xbf16>
    %cst_14 = arith.constant dense<0.000000e+00> : vector<16x32xf32>
    %18 = tpu.matmul %16, %17, %cst_14 {dimension_numbers = #tpu.dot_dimension_numbers<[1], [0], [0], [1], [0, 0, 1, 1], [], []>} : vector<16x64xbf16>, vector<64x32xbf16>, vector<16x32xf32> -> vector<16x32xf32>
    %c0_15 = arith.constant 0 : index
    %c0_16 = arith.constant 0 : index
    %19 = vector.load %arg7[%c0_15, %c0_16] : memref<1x32xf32, #tpu.memory_space<vmem>>, vector<1x32xf32>
    %20 = vector.broadcast %19 : vector<1x32xf32> to vector<16x32xf32>
    %21 = arith.addf %18, %20 : vector<16x32xf32>
    %cst_17 = arith.constant 0.000000e+00 : f32
    %22 = vector.broadcast %cst_17 : f32 to vector<16x32xf32>
    %23 = arith.maximumf %21, %22 : vector<16x32xf32>
    %24 = arith.truncf %23 : vector<16x32xf32> to vector<16x32xbf16>
    %c0_18 = arith.constant 0 : index
    %c0_19 = arith.constant 0 : index
    %25 = vector.load %arg8[%c0_18, %c0_19] : memref<32x8xbf16, #tpu.memory_space<vmem>>, vector<32x8xbf16>
    %cst_20 = arith.constant dense<0.000000e+00> : vector<16x8xf32>
    %26 = tpu.matmul %24, %25, %cst_20 {dimension_numbers = #tpu.dot_dimension_numbers<[1], [0], [0], [1], [0, 0, 1, 1], [], []>} : vector<16x32xbf16>, vector<32x8xbf16>, vector<16x8xf32> -> vector<16x8xf32>
    %c0_21 = arith.constant 0 : index
    %c0_22 = arith.constant 0 : index
    %27 = vector.load %arg9[%c0_21, %c0_22] : memref<1x8xf32, #tpu.memory_space<vmem>>, vector<1x8xf32>
    %28 = vector.broadcast %27 : vector<1x8xf32> to vector<16x8xf32>
    %29 = arith.addf %26, %28 : vector<16x8xf32>
    %cst_23 = arith.constant dense<0xFF800000> : vector<16xf32>
    %30 = vector.multi_reduction <maximumf>, %29, %cst_23 [1] : vector<16x8xf32> to vector<16xf32>
    %31 = vector.shape_cast %30 : vector<16xf32> to vector<16x1xf32>
    %32 = vector.broadcast %31 : vector<16x1xf32> to vector<16x8xf32>
    %33 = arith.subf %29, %32 : vector<16x8xf32>
    %34 = math.exp %33 : vector<16x8xf32>
    %cst_24 = arith.constant dense<0.000000e+00> : vector<16xf32>
    %35 = vector.multi_reduction <add>, %34, %cst_24 [1] : vector<16x8xf32> to vector<16xf32>
    %36 = vector.shape_cast %35 : vector<16xf32> to vector<16x1xf32>
    %37 = vector.broadcast %36 : vector<16x1xf32> to vector<16x8xf32>
    %38 = arith.divf %34, %37 : vector<16x8xf32>
    %c0_25 = arith.constant 0 : index
    %c0_26 = arith.constant 0 : index
    %39 = vector.load %arg10[%c0_25, %c0_26] : memref<16x8xf32, #tpu.memory_space<vmem>>, vector<16x8xf32>
    tpu.vector_store %arg10[%c0_25, %c0_26], %38 {strides = array<i32>} : memref<16x8xf32, #tpu.memory_space<vmem>>, vector<16x8xf32>,
    return
  }
  func.func @transform_0(%arg0: i32) -> (i32, i32) {
    %c0_i32 = arith.constant 0 : i32
    %c0_i32_0 = arith.constant 0 : i32
    return %arg0, %c0_i32 : i32, i32
  }
  func.func @transform_1(%arg0: i32) -> (i32, i32) {
    %c0_i32 = arith.constant 0 : i32
    %c0_i32_0 = arith.constant 0 : i32
    %c0_i32_1 = arith.constant 0 : i32
    return %c0_i32, %c0_i32_0 : i32, i32
  }
  func.func @transform_2(%arg0: i32) -> (i32, i32) {
    %c0_i32 = arith.constant 0 : i32
    %c0_i32_0 = arith.constant 0 : i32
    %c0_i32_1 = arith.constant 0 : i32
    return %c0_i32, %c0_i32_0 : i32, i32
  }
  func.func @transform_3(%arg0: i32) -> (i32, i32) {
    %c0_i32 = arith.constant 0 : i32
    %c0_i32_0 = arith.constant 0 : i32
    %c0_i32_1 = arith.constant 0 : i32
    return %c0_i32, %c0_i32_0 : i32, i32
  }
  func.func @transform_4(%arg0: i32) -> (i32, i32) {
    %c0_i32 = arith.constant 0 : i32
    %c0_i32_0 = arith.constant 0 : i32
    %c0_i32_1 = arith.constant 0 : i32
    return %c0_i32, %c0_i32_0 : i32, i32
  }
  func.func @transform_5(%arg0: i32) -> (i32, i32) {
    %c0_i32 = arith.constant 0 : i32
    %c0_i32_0 = arith.constant 0 : i32
    %c0_i32_1 = arith.constant 0 : i32
    return %c0_i32, %c0_i32_0 : i32, i32
  }
  func.func @transform_6(%arg0: i32) -> (i32, i32) {
    %c0_i32 = arith.constant 0 : i32
    %c0_i32_0 = arith.constant 0 : i32
    %c0_i32_1 = arith.constant 0 : i32
    return %c0_i32, %c0_i32_0 : i32, i32
  }
  func.func @transform_7(%arg0: i32) -> (i32, i32) {
    %c0_i32 = arith.constant 0 : i32
    %c0_i32_0 = arith.constant 0 : i32
    %c0_i32_1 = arith.constant 0 : i32
    return %c0_i32, %c0_i32_0 : i32, i32
  }
  func.func @transform_8(%arg0: i32) -> (i32, i32) {
    %c0_i32 = arith.constant 0 : i32
    %c0_i32_0 = arith.constant 0 : i32
    %c0_i32_1 = arith.constant 0 : i32
    return %c0_i32, %c0_i32_0 : i32, i32
  }
  func.func @transform_9(%arg0: i32) -> (i32, i32) {
    %c0_i32 = arith.constant 0 : i32
    %c0_i32_0 = arith.constant 0 : i32
    return %arg0, %c0_i32 : i32, i32
  }
}

</mosaic_0001>

<llo_original>
// kernel: solver_order_predictor.1
$region0: #{solver_order_predictor.1}
  #allocation0 [shape = 'u32[]', space=smem, size = 0x4, offset = 0x4, fixed_abs, tag = 'smem constant byte address 0x4 - core index']
  #allocation1 [shape = 'u32[144,128]{1,0:T(1,128)}', space=vmem, size = 0x12000, scoped, tag = 'internal scratch']
  %s0 = inlined_call_operand.vmem [shape: bf16[16,64], index: 0, kind: input, shape index: {}]
  %s1 = inlined_call_operand.vmem [shape: bf16[64,128], index: 1, kind: input, shape index: {}]
  %s2 = inlined_call_operand.vmem [shape: f32[1,128], index: 2, kind: input, shape index: {}]
  %s3 = inlined_call_operand.vmem [shape: bf16[128,64], index: 3, kind: input, shape index: {}]
  %s4 = inlined_call_operand.vmem [shape: f32[1,64], index: 4, kind: input, shape index: {}]
  %s5 = inlined_call_operand.vmem [shape: bf16[64,32], index: 5, kind: input, shape index: {}]
  %s6 = inlined_call_operand.vmem [shape: f32[1,32], index: 6, kind: input, shape index: {}]
  %s7 = inlined_call_operand.vmem [shape: bf16[32,8], index: 7, kind: input, shape index: {}]
  %s8 = inlined_call_operand.vmem [shape: f32[1,8], index: 8, kind: input, shape index: {}]
  %s9 = inlined_call_operand.vmem [shape: f32[16,8], index: 9, kind: output, shape index: {}]
  %s10 = sld [smem:[#allocation0]]
  $region46: #{solver_order_predictor.1} parent=0
    _
  %s12 = ssub.s32 1, %s10
  %s13 = scalar_select 0, %s12, %s10
  // Predicated region
  $region2: #{solver_order_predictor.1} parent=0 // pred_check
    _
  $region3: #{solver_order_predictor.1} parent=0 // pred_check_branch
    %15 = sbr.rel (0) target = $region5
  $region4: #{solver_order_predictor.1} parent=0 // pred_region
    _
  $region5: #{solver_order_predictor.1} parent=0 // pred_fallthru
    _
  // Predicated region
  $region6: #{solver_order_predictor.1} parent=0 // pred_check
    _
  $region7: #{solver_order_predictor.1} parent=0 // pred_check_branch
    %17 = sbr.rel (0) target = $region9
  $region8: #{solver_order_predictor.1} parent=0 // pred_region
    _
  $region9: #{solver_order_predictor.1} parent=0 // pred_fallthru
    _
  // Predicated region
  $region10: #{solver_order_predictor.1} parent=0 // pred_check
    _
  $region11: #{solver_order_predictor.1} parent=0 // pred_check_branch
    %19 = sbr.rel (0) target = $region13
  $region12: #{solver_order_predictor.1} parent=0 // pred_region
    _
  $region13: #{solver_order_predictor.1} parent=0 // pred_fallthru
    _
  // Predicated region
  $region14: #{solver_order_predictor.1} parent=0 // pred_check
    _
  $region15: #{solver_order_predictor.1} parent=0 // pred_check_branch
    %21 = sbr.rel (0) target = $region17
  $region16: #{solver_order_predictor.1} parent=0 // pred_region
    _
  $region17: #{solver_order_predictor.1} parent=0 // pred_fallthru
    _
  // Predicated region
  $region18: #{solver_order_predictor.1} parent=0 // pred_check
    _
  $region19: #{solver_order_predictor.1} parent=0 // pred_check_branch
    %23 = sbr.rel (0) target = $region21
  $region20: #{solver_order_predictor.1} parent=0 // pred_region
    _
  $region21: #{solver_order_predictor.1} parent=0 // pred_fallthru
    _
  // Predicated region
  $region22: #{solver_order_predictor.1} parent=0 // pred_check
    _
  $region23: #{solver_order_predictor.1} parent=0 // pred_check_branch
    %25 = sbr.rel (0) target = $region25
  $region24: #{solver_order_predictor.1} parent=0 // pred_region
    _
  $region25: #{solver_order_predictor.1} parent=0 // pred_fallthru
    _
  // Predicated region
  $region26: #{solver_order_predictor.1} parent=0 // pred_check
    _
  $region27: #{solver_order_predictor.1} parent=0 // pred_check_branch
    %27 = sbr.rel (0) target = $region29
  $region28: #{solver_order_predictor.1} parent=0 // pred_region
    _
  $region29: #{solver_order_predictor.1} parent=0 // pred_fallthru
    _
  // Predicated region
  $region30: #{solver_order_predictor.1} parent=0 // pred_check
    _
  $region31: #{solver_order_predictor.1} parent=0 // pred_check_branch
    %29 = sbr.rel (0) target = $region33
  $region32: #{solver_order_predictor.1} parent=0 // pred_region
    _
  $region33: #{solver_order_predictor.1} parent=0 // pred_fallthru
    _
  // Predicated region
  $region34: #{solver_order_predictor.1} parent=0 // pred_check
    _
  $region35: #{solver_order_predictor.1} parent=0 // pred_check_branch
    %31 = sbr.rel (0) target = $region37
  $region36: #{solver_order_predictor.1} parent=0 // pred_region
    _
  $region37: #{solver_order_predictor.1} parent=0 // pred_fallthru
    _
  %v33 = vld [vmem:[%s0] sm:$0xf]
  %v34 = vld [vmem:[%s0 + $0x4] sm:$0xf]
  %v35 = vld [vmem:[%s1] sm:$0xf]
  %v36 = vld [vmem:[%s1 + $0x4] sm:$0xf]
  %v37 = vld [vmem:[%s1 + $0x8] sm:$0xf]
  %v38 = vld [vmem:[%s1 + $0xc] sm:$0xf]
  %v39 = vld [vmem:[%s1 + $0x10] sm:$0xf]
  %v40 = vld [vmem:[%s1 + $0x14] sm:$0xf]
  %v41 = vld [vmem:[%s1 + $0x18] sm:$0xf]
  %v42 = vld [vmem:[%s1 + $0x1c] sm:$0xf]
  %v43 = vld [vmem:[%s2] sm:$0x1]
  %v45 = vlaneseq
  %v46 = vshrl.u32 %v45, 7
  %v47 = vsub.s32 0, %v46
  %v48 = vrot.slane %v43, %v47
  %v52 = vunpack.c.l.b16 %v33
  %v53 = vunpack.c.l.b16 %v34
  %v54 = vpack.c.b16 %v53, %v52
  %v63 = vunpack.c.l.b16 %v35
  %v64 = vunpack.c.l.b16 %v36
  %v65 = vunpack.c.l.b16 %v37
  %v66 = vunpack.c.l.b16 %v38
  %v67 = vunpack.c.l.b16 %v39
  %v68 = vunpack.c.l.b16 %v40
  %v69 = vunpack.c.l.b16 %v41
  %v70 = vunpack.c.l.b16 %v42
  %v71 = vpack.c.b16 %v64, %v63
  %v72 = vpack.c.b16 %v66, %v65
  %v73 = vpack.c.b16 %v68, %v67
  %v74 = vpack.c.b16 %v70, %v69
  %vm79 = vcmask 523264
  %v81 = vsel %vm79, %v54, 0
  %83 = vmatprep.subr.bf16.mxu0 0
  %84 = vmatpush1.bf16.msra.mxu0 %v71
  %85 = vmatprep.subr.bf16.mxu0 0
  %86 = vmatpush1.bf16.msra.mxu0 %v72
  %87 = vmatprep.subr.bf16.mxu0 0
  %88 = vmatpush1.bf16.msra.mxu0 %v73
  %89 = vmatprep.subr.bf16.mxu0 0
  %90 = vmatpush1.bf16.msra.mxu0 %v74
  %91 = vmatprep.subr.bf16.mxu0 0
  %92 = vmatpush1.bf16.msra.mxu0 0
  %93 = vmatprep.subr.bf16.mxu0 0
  %94 = vmatpush1.bf16.msra.mxu0 0
  %95 = vmatprep.subr.bf16.mxu0 0
  %96 = vmatpush1.bf16.msra.mxu0 0
  %97 = vmatprep.subr.bf16.mxu0 0
  %98 = vmatpush1.bf16.msra.mxu0 0
  %99 = vmatprep.subr.bf16.mxu0 0
  %100 = vmatpush1.bf16.msra.mxu0 0
  %101 = vmatprep.subr.bf16.mxu0 0
  %102 = vmatpush1.bf16.msra.mxu0 0
  %103 = vmatprep.subr.bf16.mxu0 0
  %104 = vmatpush1.bf16.msra.mxu0 0
  %105 = vmatprep.subr.bf16.mxu0 0
  %106 = vmatpush1.bf16.msra.mxu0 0
  %107 = vmatprep.subr.bf16.mxu0 0
  %108 = vmatpush1.bf16.msra.mxu0 0
  %109 = vmatprep.subr.bf16.mxu0 0
  %110 = vmatpush1.bf16.msra.mxu0 0
  %111 = vmatprep.subr.bf16.mxu0 0
  %112 = vmatpush1.bf16.msra.mxu0 0
  %113 = vmatprep.subr.bf16.mxu0 0
  %114 = vmatpush1.bf16.msra.mxu0 0
  %115 = vmatprep.mubr.bf16.mxu0 0
  %116 = vmatmul.mubr.bf16.gmra.mrb[0].mxu0 %v81
  %v117 = vpop.f32.mrb[0].mxu0
  %v118 = vadd.f32 %v48, %v117
  %v119 = vpop.f32.mrb[0].mxu0
  %v120 = vpop.f32.mrb[0].mxu0
  %v121 = vadd.f32 %v48, %v120
  %v122 = vpop.f32.mrb[0].mxu0
  %123 = vdwg.mxu0
  %v124 = vmax.f32 %v118, 0.0
  %v125 = vmax.f32 %v121, 0.0
  %v126 = vpack.c.bf16 %v125, %v124
  %v127 = vld [vmem:[%s3] sm:$0xf]
  %v128 = vld [vmem:[%s3 + $0x4] sm:$0xf]
  %v129 = vld [vmem:[%s3 + $0x8] sm:$0xf]
  %v130 = vld [vmem:[%s3 + $0xc] sm:$0xf]
  %v131 = vld [vmem:[%s3 + $0x10] sm:$0xf]
  %v132 = vld [vmem:[%s3 + $0x14] sm:$0xf]
  %v133 = vld [vmem:[%s3 + $0x18] sm:$0xf]
  %v134 = vld [vmem:[%s3 + $0x1c] sm:$0xf]
  %v135 = vld [vmem:[%s3 + $0x20] sm:$0xf]
  %v136 = vld [vmem:[%s3 + $0x24] sm:$0xf]
  %v137 = vld [vmem:[%s3 + $0x28] sm:$0xf]
  %v138 = vld [vmem:[%s3 + $0x2c] sm:$0xf]
  %v139 = vld [vmem:[%s3 + $0x30] sm:$0xf]
  %v140 = vld [vmem:[%s3 + $0x34] sm:$0xf]
  %v141 = vld [vmem:[%s3 + $0x38] sm:$0xf]
  %v142 = vld [vmem:[%s3 + $0x3c] sm:$0xf]
  %v143 = vld [vmem:[%s4] sm:$0x1]
  %v145 = vlaneseq
  %v146 = vshrl.u32 %v145, 7
  %v147 = vsub.s32 0, %v146
  %v148 = vrot.slane %v143, %v147
  %v166 = vunpack.c.l.b16 %v127
  %v167 = vunpack.c.l.b16 %v128
  %v168 = vunpack.c.l.b16 %v129
  %v169 = vunpack.c.l.b16 %v130
  %v170 = vunpack.c.l.b16 %v131
  %v171 = vunpack.c.l.b16 %v132
  %v172 = vunpack.c.l.b16 %v133
  %v173 = vunpack.c.l.b16 %v134
  %v174 = vunpack.c.l.b16 %v135
  %v175 = vunpack.c.l.b16 %v136
  %v176 = vunpack.c.l.b16 %v137
  %v177 = vunpack.c.l.b16 %v138
  %v178 = vunpack.c.l.b16 %v139
  %v179 = vunpack.c.l.b16 %v140
  %v180 = vunpack.c.l.b16 %v141
  %v181 = vunpack.c.l.b16 %v142
  %v182 = vpack.c.b16 %v167, %v166
  %v183 = vpack.c.b16 %v169, %v168
  %v184 = vpack.c.b16 %v171, %v170
  %v185 = vpack.c.b16 %v173, %v172
  %v186 = vpack.c.b16 %v175, %v174
  %v187 = vpack.c.b16 %v177, %v176
  %v188 = vpack.c.b16 %v179, %v178
  %v189 = vpack.c.b16 %v181, %v180
  %198 = vmatprep.subr.bf16.mxu0 0
  %199 = vmatpush1.bf16.msra.mxu0 %v182
  %200 = vmatprep.subr.bf16.mxu0 0
  %201 = vmatpush1.bf16.msra.mxu0 %v183
  %202 = vmatprep.subr.bf16.mxu0 0
  %203 = vmatpush1.bf16.msra.mxu0 %v184
  %204 = vmatprep.subr.bf16.mxu0 0
  %205 = vmatpush1.bf16.msra.mxu0 %v185
  %206 = vmatprep.subr.bf16.mxu0 0
  %207 = vmatpush1.bf16.msra.mxu0 %v186
  %208 = vmatprep.subr.bf16.mxu0 0
  %209 = vmatpush1.bf16.msra.mxu0 %v187
  %210 = vmatprep.subr.bf16.mxu0 0
  %211 = vmatpush1.bf16.msra.mxu0 %v188
  %212 = vmatprep.subr.bf16.mxu0 0
  %213 = vmatpush1.bf16.msra.mxu0 %v189
  %214 = vmatprep.subr.bf16.mxu0 0
  %215 = vmatpush1.bf16.msra.mxu0 0
  %216 = vmatprep.subr.bf16.mxu0 0
  %217 = vmatpush1.bf16.msra.mxu0 0
  %218 = vmatprep.subr.bf16.mxu0 0
  %219 = vmatpush1.bf16.msra.mxu0 0
  %220 = vmatprep.subr.bf16.mxu0 0
  %221 = vmatpush1.bf16.msra.mxu0 0
  %222 = vmatprep.subr.bf16.mxu0 0
  %223 = vmatpush1.bf16.msra.mxu0 0
  %224 = vmatprep.subr.bf16.mxu0 0
  %225 = vmatpush1.bf16.msra.mxu0 0
  %226 = vmatprep.subr.bf16.mxu0 0
  %227 = vmatpush1.bf16.msra.mxu0 0
  %228 = vmatprep.subr.bf16.mxu0 0
  %229 = vmatpush1.bf16.msra.mxu0 0
  %230 = vmatprep.mubr.bf16.mxu0 0
  %231 = vmatmul.mubr.bf16.gmra.mrb[0].mxu0 %v126
  %v232 = vpop.f32.mrb[0].mxu0
  %v233 = vadd.f32 %v148, %v232
  %v234 = vpop.f32.mrb[0].mxu0
  %v235 = vpop.f32.mrb[0].mxu0
  %v236 = vadd.f32 %v148, %v235
  %v237 = vpop.f32.mrb[0].mxu0
  %238 = vdwg.mxu0
  %v239 = vmax.f32 %v233, 0.0
  %v240 = vmax.f32 %v236, 0.0
  %v241 = vpack.c.bf16 %v240, %v239
  %v242 = vld [vmem:[%s5] sm:$0xf]
  %v243 = vld [vmem:[%s5 + $0x4] sm:$0xf]
  %v244 = vld [vmem:[%s5 + $0x8] sm:$0xf]
  %v245 = vld [vmem:[%s5 + $0xc] sm:$0xf]
  %v246 = vld [vmem:[%s5 + $0x10] sm:$0xf]
  %v247 = vld [vmem:[%s5 + $0x14] sm:$0xf]
  %v248 = vld [vmem:[%s5 + $0x18] sm:$0xf]
  %v249 = vld [vmem:[%s5 + $0x1c] sm:$0xf]
  %v250 = vld [vmem:[%s6] sm:$0x1]
  %v252 = vlaneseq
  %v253 = vshrl.u32 %v252, 7
  %v254 = vsub.s32 0, %v253
  %v255 = vrot.slane %v250, %v254
  %v265 = vunpack.c.l.b16 %v242
  %v266 = vunpack.c.l.b16 %v243
  %v267 = vunpack.c.l.b16 %v244
  %v268 = vunpack.c.l.b16 %v245
  %v269 = vunpack.c.l.b16 %v246
  %v270 = vunpack.c.l.b16 %v247
  %v271 = vunpack.c.l.b16 %v248
  %v272 = vunpack.c.l.b16 %v249
  %v273 = vpack.c.b16 %v266, %v265
  %v274 = vpack.c.b16 %v268, %v267
  %v275 = vpack.c.b16 %v270, %v269
  %v276 = vpack.c.b16 %v272, %v271
  %v282 = vsel %vm79, %v241, 0
  %284 = vmatprep.subr.bf16.mxu0 0
  %285 = vmatpush1.bf16.msra.mxu0 %v273
  %286 = vmatprep.subr.bf16.mxu0 0
  %287 = vmatpush1.bf16.msra.mxu0 %v274
  %288 = vmatprep.subr.bf16.mxu0 0
  %289 = vmatpush1.bf16.msra.mxu0 %v275
  %290 = vmatprep.subr.bf16.mxu0 0
  %291 = vmatpush1.bf16.msra.mxu0 %v276
  %292 = vmatprep.subr.bf16.mxu0 0
  %293 = vmatpush1.bf16.msra.mxu0 0
  %294 = vmatprep.subr.bf16.mxu0 0
  %295 = vmatpush1.bf16.msra.mxu0 0
  %296 = vmatprep.subr.bf16.mxu0 0
  %297 = vmatpush1.bf16.msra.mxu0 0
  %298 = vmatprep.subr.bf16.mxu0 0
  %299 = vmatpush1.bf16.msra.mxu0 0
  %300 = vmatprep.subr.bf16.mxu0 0
  %301 = vmatpush1.bf16.msra.mxu0 0
  %302 = vmatprep.subr.bf16.mxu0 0
  %303 = vmatpush1.bf16.msra.mxu0 0
  %304 = vmatprep.subr.bf16.mxu0 0
  %305 = vmatpush1.bf16.msra.mxu0 0
  %306 = vmatprep.subr.bf16.mxu0 0
  %307 = vmatpush1.bf16.msra.mxu0 0
  %308 = vmatprep.subr.bf16.mxu0 0
  %309 = vmatpush1.bf16.msra.mxu0 0
  %310 = vmatprep.subr.bf16.mxu0 0
  %311 = vmatpush1.bf16.msra.mxu0 0
  %312 = vmatprep.subr.bf16.mxu0 0
  %313 = vmatpush1.bf16.msra.mxu0 0
  %314 = vmatprep.subr.bf16.mxu0 0
  %315 = vmatpush1.bf16.msra.mxu0 0
  %316 = vmatprep.mubr.bf16.mxu0 0
  %317 = vmatmul.mubr.bf16.gmra.mrb[0].mxu0 %v282
  %v318 = vpop.f32.mrb[0].mxu0
  %v319 = vadd.f32 %v255, %v318
  %v320 = vpop.f32.mrb[0].mxu0
  %v321 = vpop.f32.mrb[0].mxu0
  %v322 = vadd.f32 %v255, %v321
  %v323 = vpop.f32.mrb[0].mxu0
  %324 = vdwg.mxu0
  %v325 = vmax.f32 %v319, 0.0
  %v326 = vmax.f32 %v322, 0.0
  %v327 = vpack.c.bf16 %v326, %v325
  %v328 = vld [vmem:[%s7] sm:$0xf]
  %v329 = vld [vmem:[%s7 + $0x4] sm:$0xf]
  %v330 = vld [vmem:[%s7 + $0x8] sm:$0xf]
  %v331 = vld [vmem:[%s7 + $0xc] sm:$0xf]
  %v332 = vld [vmem:[%s8] sm:$0x1]
  %v334 = vlaneseq
  %v335 = vshrl.u32 %v334, 7
  %v336 = vsub.s32 0, %v335
  %v337 = vrot.slane %v332, %v336
  %v343 = vunpack.c.l.b16 %v328
  %v344 = vunpack.c.l.b16 %v329
  %v345 = vunpack.c.l.b16 %v330
  %v346 = vunpack.c.l.b16 %v331
  %v347 = vpack.c.b16 %v344, %v343
  %v348 = vpack.c.b16 %v346, %v345
  %vm351 = vcmask 261120
  %v353 = vsel %vm351, %v327, 0
  %355 = vmatprep.subr.bf16.mxu0 0
  %356 = vmatpush1.bf16.msra.mxu0 %v347
  %357 = vmatprep.subr.bf16.mxu0 0
  %358 = vmatpush1.bf16.msra.mxu0 %v348
  %359 = vmatprep.subr.bf16.mxu0 0
  %360 = vmatpush1.bf16.msra.mxu0 0
  %361 = vmatprep.subr.bf16.mxu0 0
  %362 = vmatpush1.bf16.msra.mxu0 0
  %363 = vmatprep.subr.bf16.mxu0 0
  %364 = vmatpush1.bf16.msra.mxu0 0
  %365 = vmatprep.subr.bf16.mxu0 0
  %366 = vmatpush1.bf16.msra.mxu0 0
  %367 = vmatprep.subr.bf16.mxu0 0
  %368 = vmatpush1.bf16.msra.mxu0 0
  %369 = vmatprep.subr.bf16.mxu0 0
  %370 = vmatpush1.bf16.msra.mxu0 0
  %371 = vmatprep.subr.bf16.mxu0 0
  %372 = vmatpush1.bf16.msra.mxu0 0
  %373 = vmatprep.subr.bf16.mxu0 0
  %374 = vmatpush1.bf16.msra.mxu0 0
  %375 = vmatprep.subr.bf16.mxu0 0
  %376 = vmatpush1.bf16.msra.mxu0 0
  %377 = vmatprep.subr.bf16.mxu0 0
  %378 = vmatpush1.bf16.msra.mxu0 0
  %379 = vmatprep.subr.bf16.mxu0 0
  %380 = vmatpush1.bf16.msra.mxu0 0
  %381 = vmatprep.subr.bf16.mxu0 0
  %382 = vmatpush1.bf16.msra.mxu0 0
  %383 = vmatprep.subr.bf16.mxu0 0
  %384 = vmatpush1.bf16.msra.mxu0 0
  %385 = vmatprep.subr.bf16.mxu0 0
  %386 = vmatpush1.bf16.msra.mxu0 0
  %387 = vmatprep.mubr.bf16.mxu0 0
  %388 = vmatmul.mubr.bf16.gmra.mrb[0].mxu0 %v353
  %v389 = vpop.f32.mrb[0].mxu0
  %v390 = vadd.f32 %v337, %v389
  %v391 = vpop.f32.mrb[0].mxu0
  %v392 = vpop.f32.mrb[0].mxu0
  %v393 = vadd.f32 %v337, %v392
  %v394 = vpop.f32.mrb[0].mxu0
  %395 = vdwg.mxu0
  %vm396 = vcmask 64512
  %v397 = vsel %vm396, %v390, -inf
  %398 = vmax.xlane.f32.xlu0 %v397
  %v399 = vpop.xlane.xlu0 %398
  %v400 = vsel %vm396, %v393, -inf
  %401 = vmax.xlane.f32.xlu0 %v400
  %v402 = vpop.xlane.xlu0 %401
  %v403 = vsub.f32 %v390, %v399
  %v404 = vsub.f32 %v393, %v402
  %v405 = vmul.f32 %v403, 1.442695
  %v406 = vpow.pop %v405
  %v407 = vmul.f32 %v404, 1.442695
  %v408 = vpow.pop %v407
  %v409 = vsel %vm396, %v406, 0.0
  %410 = vadd.xlane.f32.xlu0 %v409
  %v411 = vpop.xlane.xlu0 %410
  %v412 = vsel %vm396, %v408, 0.0
  %413 = vadd.xlane.f32.xlu0 %v412
  %v414 = vpop.xlane.xlu0 %413
  %v415 = vrcp.pop %v411
  %v416 = vmul.f32 %v406, %v415
  %v417 = vrcp.pop %v414
  %v418 = vmul.f32 %v408, %v417
  %419 = vst.msk [vmem:[%s9] sm:$0xff] %vm396, %v416
  %420 = vst.msk [vmem:[%s9 + $0x8] sm:$0xff] %vm396, %v418
  // Predicated region
  $region38: #{solver_order_predictor.1} parent=0 // pred_check
    _
  $region39: #{solver_order_predictor.1} parent=0 // pred_check_branch
    %422 = sbr.rel (0) target = $region41
  $region40: #{solver_order_predictor.1} parent=0 // pred_region
    _
  $region41: #{solver_order_predictor.1} parent=0 // pred_fallthru
    _
  // Predicated region
  $region42: #{solver_order_predictor.1} parent=0 // pred_check
    _
  $region43: #{solver_order_predictor.1} parent=0 // pred_check_branch
    %424 = sbr.rel (0) target = $region45
  $region44: #{solver_order_predictor.1} parent=0 // pred_region
    _
  $region45: #{solver_order_predictor.1} parent=0 // pred_fallthru
    _

</llo_original>
